<compile_context>
chip_gen: v6e
topology: v6e:2x2x1
jax: 0.10.0
libtpu: 0.0.40
codegen_flags: <defaults>
</compile_context>

<pallas_src>
import math

import jax
import jax.numpy as jnp
from jax import lax
from jax.experimental import pallas as pl
from jax.experimental.pallas import tpu as pltpu


def _round_up(x, m):
    return ((x + m - 1) // m) * m


def _round_down(x, m):
    return (x // m) * m


def _vmem_info():
    """Returns (tile budget, physical VMEM capacity) in bytes."""
    cap = 64 * 1024 * 1024  # conservative default (v7x has 64 MiB per core)
    try:
        cap = int(pltpu.get_tpu_info().vmem_capacity_bytes)
    except Exception:
        pass  # not on TPU / older jax: keep conservative default
    return cap // 2, cap


def _choose_tiles(M, K, E, itemsize, budget):
    """Pick (tm, tk, te, k_tiles). tk always divides K exactly."""
    # E tile: keep whole unless large and 128-aligned (then lane-dense tiles).
    te = E
    if E % 128 == 0 and E > 2048:
        for cand in (2048, 1024, 512, 256, 128):
            if E % cand == 0:
                te = cand
                break

    # K tile: keep whole unless the (K, te) weight block alone eats the budget.
    tk = K
    if K > 8 and 2 * K * te * itemsize > budget // 4:
        cap_rows = max(8, (budget // 4) // max(1, 2 * te * itemsize))
        start = _round_down(min(cap_rows, K), 8)
        for t in range(start, 7, -8):  # largest multiple of 8 dividing K
            if K % t == 0:
                tk = t
                break
    k_tiles = K // tk

    # M tile: as many rows as VMEM allows; lane-aligned (128) when tiled.
    row_bytes = 2 * tk * itemsize + 2 * te * 4 + (te * 4 if k_tiles > 1 else 0)
    fixed = 2 * tk * te * itemsize  # double-buffered weight blocks
    max_rows = max(128, (budget - fixed) // row_bytes)

    if M <= min(max_rows, 2048):
        tm = M  # single grid step: full block, no alignment constraints
    else:
        tm = max(128, _round_down(min(max_rows, 16384), 128))
        if pl.cdiv(M, tm) < 4:  # keep >=2 steps per v7x TensorCore pipelined
            tm = max(128, _round_up(pl.cdiv(M, 4), 128))
    return tm, tk, te, k_tiles


def _gemm_kernel(x_ref, w_ref, o_ref):
    # x_ref: (K, tm) transposed LHS (contract axis 0)  -- lane axis is tm
    # w_ref: (K, te), o_ref: (tm, te)
    o_ref[...] = lax.dot_general(
        x_ref[...],
        w_ref[...],
        dimension_numbers=(((0,), (0,)), ((), ())),
        preferred_element_type=jnp.float32,
    ).astype(o_ref.dtype)


def _gemm_acc_kernel(x_ref, w_ref, o_ref, acc_ref):
    # Same as above but with a K grid axis and an f32 VMEM accumulator.
    k = pl.program_id(2)

    @pl.when(k == 0)
    def _():
        acc_ref[...] = jnp.zeros_like(acc_ref)

    acc_ref[...] += lax.dot_general(
        x_ref[...],
        w_ref[...],
        dimension_numbers=(((0,), (0,)), ((), ())),
        preferred_element_type=jnp.float32,
    )

    @pl.when(k == pl.num_programs(2) - 1)
    def _():
        o_ref[...] = acc_ref[...].astype(o_ref.dtype)


def graph_embedding_forward(inputs, embedding, *, compute_dtype=jnp.float32):
    """inputs: (B, K, S); embedding: (K, E) -> (B, S, E) float32.

    compute_dtype: MXU operand dtype (f32 matches torch .float(); bf16 halves
    HBM traffic and VMEM, accumulation stays f32 either way).
    """
    B, K, S = inputs.shape
    K2, E = embedding.shape
    assert K == K2, "embedding rows must match input_size"
    M = B * S

    # Single fused HBM pass over `inputs`: (B,K,S) -> (K, B*S) lane-dense
    # transposed-LHS slab in the compute dtype.
    x2 = jnp.transpose(inputs, (1, 0, 2)).reshape(K, M).astype(compute_dtype)
    w = embedding.astype(compute_dtype)

    itemsize = jnp.dtype(compute_dtype).itemsize
    budget, vmem_cap = _vmem_info()
    tm, tk, te, k_tiles = _choose_tiles(M, K, E, itemsize, budget)
    gm, ge = pl.cdiv(M, tm), pl.cdiv(E, te)

    if k_tiles == 1:
        grid = (gm, ge)
        in_specs = [
            pl.BlockSpec((K, tm), lambda i, j: (0, i)),
            pl.BlockSpec((K, te), lambda i, j: (0, j)),
        ]
        out_specs = pl.BlockSpec((tm, te), lambda i, j: (i, j))
        scratch = []
        kernel = _gemm_kernel
        dims = ("parallel", "parallel")
    else:
        grid = (gm, ge, k_tiles)  # reduction axis last
        in_specs = [
            pl.BlockSpec((tk, tm), lambda i, j, k: (k, i)),
            pl.BlockSpec((tk, te), lambda i, j, k: (k, j)),
        ]
        out_specs = pl.BlockSpec((tm, te), lambda i, j, k: (i, j))
        scratch = [pltpu.VMEM((tm, te), jnp.float32)]
        kernel = _gemm_acc_kernel
        dims = ("parallel", "parallel", "arbitrary")

    # VMEM actually used (double-buffered x/w/out tiles + accumulator).
    vmem_use = (2 * tk * tm + 2 * tk * te) * itemsize + 2 * tm * te * 4
    if k_tiles > 1:
        vmem_use += tm * te * 4
    vmem_limit = int(min(vmem_cap * 3 // 4, max(32 * 1024 * 1024, 2 * vmem_use)))

    out2 = pl.pallas_call(
        kernel,
        out_shape=jax.ShapeDtypeStruct((M, E), jnp.float32),
        grid_spec=pltpu.PrefetchScalarGridSpec(
            num_scalar_prefetch=0,
            grid=grid,
            in_specs=in_specs,
            out_specs=out_specs,
            scratch_shapes=scratch,
        ),
        compiler_params=pltpu.CompilerParams(
            dimension_semantics=dims,
            vmem_limit_bytes=vmem_limit,
        ),
    )(x2, w)

    # (M, E) -> (B, S, E): contiguous, free reshape (no extra HBM pass).
    return out2.reshape(B, S, E)


if __name__ == "__main__":
    # Shapes implied by the module's forward:
    #   batch=2, input_size=16 (graph nodes), seq_len=8, embedding_size=32
    B, K, S, E = 2, 16, 8, 32

    key = jax.random.PRNGKey(0)
    k_in, k_emb = jax.random.split(key)

    inputs = jax.random.normal(k_in, (B, K, S), dtype=jnp.float32)

    # Deterministic stand-in for nn.Parameter(...).uniform_(-1/sqrt(E), 1/sqrt(E))
    bound = 1.0 / math.sqrt(E)
    embedding = jax.random.uniform(
        k_emb, (K, E), dtype=jnp.float32, minval=-bound, maxval=bound
    )

    fwd = jax.jit(graph_embedding_forward)

    # Small case (single grid step).
    out = jax.block_until_ready(fwd(inputs, embedding))
    ref = jnp.einsum("bks,ke->bse", inputs, embedding,
                     precision=jax.lax.Precision.HIGHEST)
    assert out.shape == (B, S, E)
    assert out.dtype == jnp.float32
    assert jnp.allclose(out, ref, atol=1e-4, rtol=1e-4)

    # Larger case exercising the multi-step tiled-M grid (M = 4096 -> 4 steps).
    B2, S2 = 8, 512
    inputs2 = jax.random.normal(jax.random.PRNGKey(1), (B2, K, S2), dtype=jnp.float32)
    out2 = jax.block_until_ready(fwd(inputs2, embedding))
    ref2 = jnp.einsum("bks,ke->bse", inputs2, embedding,
                      precision=jax.lax.Precision.HIGHEST)
    assert out2.shape == (B2, S2, E)
    assert jnp.allclose(out2, ref2, atol=1e-4, rtol=1e-4)

    print("KERNEL_OK")
</pallas_src>

<mosaic_0001>
module attributes {stable_mosaic.version = 11 : i64} {
  func.func @_gemm_kernel(%arg0: i32, %arg1: i32, %arg2: memref<16x16xf32, #tpu.memory_space<vmem>>, %arg3: memref<16x32xf32, #tpu.memory_space<vmem>>, %arg4: memref<16x32xf32, #tpu.memory_space<vmem>>) attributes {dimension_semantics = [#tpu.dimension_semantics<parallel>, #tpu.dimension_semantics<parallel>], iteration_bounds = array<i64: 1, 1>, scalar_prefetch = 0 : i64, scratch_operands = 0 : i64, tpu.core_type = #tpu.core_type<tc>, window_params = [{transform_indices = @transform_0, window_bounds = array<i64: 16, 16>}, {transform_indices = @transform_1, window_bounds = array<i64: 16, 32>}, {transform_indices = @transform_2, window_bounds = array<i64: 16, 32>}]} {
    %c0 = arith.constant 0 : index
    %c0_0 = arith.constant 0 : index
    %0 = vector.load %arg2[%c0, %c0_0] : memref<16x16xf32, #tpu.memory_space<vmem>>, vector<16x16xf32>
    %c0_1 = arith.constant 0 : index
    %c0_2 = arith.constant 0 : index
    %1 = vector.load %arg3[%c0_1, %c0_2] : memref<16x32xf32, #tpu.memory_space<vmem>>, vector<16x32xf32>
    %cst = arith.constant dense<0.000000e+00> : vector<16x32xf32>
    %2 = tpu.matmul %0, %1, %cst {dimension_numbers = #tpu.dot_dimension_numbers<[0], [0], [1], [1], [0, 1, 1, 1], [], []>} : vector<16x16xf32>, vector<16x32xf32>, vector<16x32xf32> -> vector<16x32xf32>
    %c0_3 = arith.constant 0 : index
    %c0_4 = arith.constant 0 : index
    %3 = vector.load %arg4[%c0_3, %c0_4] : memref<16x32xf32, #tpu.memory_space<vmem>>, vector<16x32xf32>
    tpu.vector_store %arg4[%c0_3, %c0_4], %2 {strides = array<i32>} : memref<16x32xf32, #tpu.memory_space<vmem>>, vector<16x32xf32>,
    return
  }
  func.func @transform_0(%arg0: i32, %arg1: i32) -> (i32, i32) {
    %c0_i32 = arith.constant 0 : i32
    %c0_i32_0 = arith.constant 0 : i32
    return %c0_i32, %arg0 : i32, i32
  }
  func.func @transform_1(%arg0: i32, %arg1: i32) -> (i32, i32) {
    %c0_i32 = arith.constant 0 : i32
    %c0_i32_0 = arith.constant 0 : i32
    return %c0_i32, %arg1 : i32, i32
  }
  func.func @transform_2(%arg0: i32, %arg1: i32) -> (i32, i32) {
    %c0_i32 = arith.constant 0 : i32
    return %arg0, %arg1 : i32, i32
  }
}

</mosaic_0001>

<llo_original>
// kernel: graph_embedding_forward.1
$region0: #{graph_embedding_forward.1}
  #allocation0 [shape = 'u32[]', space=smem, size = 0x4, offset = 0x4, fixed_abs, tag = 'smem constant byte address 0x4 - core index']
  #allocation1 [shape = 'u32[144,128]{1,0:T(1,128)}', space=vmem, size = 0x12000, scoped, tag = 'internal scratch']
  %s0 = inlined_call_operand.vmem [shape: f32[16,16], index: 0, kind: input, shape index: {}]
  %s1 = inlined_call_operand.vmem [shape: f32[16,32], index: 1, kind: input, shape index: {}]
  %s2 = inlined_call_operand.hbm [shape: f32[16,32], index: 2, kind: output, shape index: {}]
  %s3 = sld [smem:[#allocation0]]
  $region18: #{graph_embedding_forward.1} parent=0
    _
  %s5 = ssub.s32 1, %s3
  %s6 = scalar_select 0, %s5, %s3
  $region1: #{graph_embedding_forward.1} parent=0
    #allocation2 [shape = 'u8[8192]{0}', space=vmem, size = 0x2000, scoped, tag = 'output window, operand 0, single buffered']
    #allocation3 [shape = 's32[1]{0}', space=sflag, size = 0x4, scoped, tag = 'scoped memory for graph_embedding_forward.1']
    %7 = vsyncpa [#allocation3], 0
    // Predicated region
    $region2: #{graph_embedding_forward.1} parent=1 // pred_check
      _
    $region3: #{graph_embedding_forward.1} parent=1 // pred_check_branch
      %9 = sbr.rel (0) target = $region5
    $region4: #{graph_embedding_forward.1} parent=1 // pred_region
      _
    $region5: #{graph_embedding_forward.1} parent=1 // pred_fallthru
      _
    // Predicated region
    $region6: #{graph_embedding_forward.1} parent=1 // pred_check
      _
    $region7: #{graph_embedding_forward.1} parent=1 // pred_check_branch
      %11 = sbr.rel (0) target = $region9
    $region8: #{graph_embedding_forward.1} parent=1 // pred_region
      _
    $region9: #{graph_embedding_forward.1} parent=1 // pred_fallthru
      _
    %v12 = vld [vmem:[%s0] sm:$0xff]
    %v13 = vld [vmem:[%s0 + $0x8] sm:$0xff]
    %v14 = vld [vmem:[%s1] sm:$0xff]
    %v15 = vld [vmem:[%s1 + $0x8] sm:$0xff]
    %16 = vxpose.xlu0.b32.start [1/16] %v12, 128
    %17 = vxpose.xlu0.b32.cont [2/16] %v13, 128
    %18 = vxpose.xlu0.b32.cont [3/16] 0.0, 128
    %19 = vxpose.xlu0.b32.cont [4/16] 0.0, 128
    %20 = vxpose.xlu0.b32.cont [5/16] 0.0, 128
    %21 = vxpose.xlu0.b32.cont [6/16] 0.0, 128
    %22 = vxpose.xlu0.b32.cont [7/16] 0.0, 128
    %23 = vxpose.xlu0.b32.cont [8/16] 0.0, 128
    %24 = vxpose.xlu0.b32.cont [9/16] 0.0, 128
    %25 = vxpose.xlu0.b32.cont [10/16] 0.0, 128
    %26 = vxpose.xlu0.b32.cont [11/16] 0.0, 128
    %27 = vxpose.xlu0.b32.cont [12/16] 0.0, 128
    %28 = vxpose.xlu0.b32.cont [13/16] 0.0, 128
    %29 = vxpose.xlu0.b32.cont [14/16] 0.0, 128
    %30 = vxpose.xlu0.b32.cont [15/16] 0.0, 128
    %31 = vxpose.xlu0.b32.end [16/16] 0.0, 128
    %v32 = vpop.trf.xlu0
    %v33 = vpop.trf.xlu0
    %v34 = vpop.trf.xlu0
    %v35 = vpop.trf.xlu0
    %v36 = vpop.trf.xlu0
    %v37 = vpop.trf.xlu0
    %v38 = vpop.trf.xlu0
    %v39 = vpop.trf.xlu0
    %v40 = vpop.trf.xlu0
    %v41 = vpop.trf.xlu0
    %v42 = vpop.trf.xlu0
    %v43 = vpop.trf.xlu0
    %v44 = vpop.trf.xlu0
    %v45 = vpop.trf.xlu0
    %v46 = vpop.trf.xlu0
    %v47 = vpop.trf.xlu0
    %vm48 = vcmask 130048
    %v50 = vsel %vm48, %v32, 0
    %v53 = vsel %vm48, %v33, 0
    %55 = vmatprep.subr.mxu0 0.0
    %56 = vmatpush1.msra.mxu0 0.0
    %57 = vmatprep.subr.mxu0 0.0
    %58 = vmatpush1.msra.mxu0 0.0
    %59 = vmatprep.subr.mxu0 0.0
    %60 = vmatpush1.msra.mxu0 0.0
    %61 = vmatprep.subr.mxu0 0.0
    %62 = vmatpush1.msra.mxu0 0.0
    %63 = vmatprep.subr.mxu0 0.0
    %64 = vmatpush1.msra.mxu0 0.0
    %65 = vmatprep.subr.mxu0 0.0
    %66 = vmatpush1.msra.mxu0 0.0
    %67 = vmatprep.subr.mxu0 0.0
    %68 = vmatpush1.msra.mxu0 0.0
    %69 = vmatprep.subr.mxu0 0.0
    %70 = vmatpush1.msra.mxu0 0.0
    %71 = vmatprep.subr.mxu0 0.0
    %72 = vmatpush1.msra.mxu0 0.0
    %73 = vmatprep.subr.mxu0 0.0
    %74 = vmatpush1.msra.mxu0 0.0
    %75 = vmatprep.subr.mxu0 0.0
    %76 = vmatpush1.msra.mxu0 0.0
    %77 = vmatprep.subr.mxu0 0.0
    %78 = vmatpush1.msra.mxu0 0.0
    %79 = vmatprep.subr.mxu0 0.0
    %80 = vmatpush1.msra.mxu0 0.0
    %81 = vmatprep.subr.mxu0 0.0
    %82 = vmatpush1.msra.mxu0 0.0
    %83 = vmatprep.subr.mxu0 0.0
    %84 = vmatpush1.msra.mxu0 %v15
    %85 = vmatprep.subr.mxu0 0.0
    %86 = vmatpush1.msra.mxu0 %v14
    %87 = vmatprep.subr.mxu0 0.0
    %88 = vmatpush2.msra.mxu0 0.0
    %89 = vmatprep.subr.mxu0 0.0
    %90 = vmatpush2.msra.mxu0 0.0
    %91 = vmatprep.subr.mxu0 0.0
    %92 = vmatpush2.msra.mxu0 0.0
    %93 = vmatprep.subr.mxu0 0.0
    %94 = vmatpush2.msra.mxu0 0.0
    %95 = vmatprep.subr.mxu0 0.0
    %96 = vmatpush2.msra.mxu0 0.0
    %97 = vmatprep.subr.mxu0 0.0
    %98 = vmatpush2.msra.mxu0 0.0
    %99 = vmatprep.subr.mxu0 0.0
    %100 = vmatpush2.msra.mxu0 0.0
    %101 = vmatprep.subr.mxu0 0.0
    %102 = vmatpush2.msra.mxu0 0.0
    %103 = vmatprep.subr.mxu0 0.0
    %104 = vmatpush2.msra.mxu0 0.0
    %105 = vmatprep.subr.mxu0 0.0
    %106 = vmatpush2.msra.mxu0 0.0
    %107 = vmatprep.subr.mxu0 0.0
    %108 = vmatpush2.msra.mxu0 0.0
    %109 = vmatprep.subr.mxu0 0.0
    %110 = vmatpush2.msra.mxu0 0.0
    %111 = vmatprep.subr.mxu0 0.0
    %112 = vmatpush2.msra.mxu0 0.0
    %113 = vmatprep.subr.mxu0 0.0
    %114 = vmatpush2.msra.mxu0 0.0
    %115 = vmatprep.subr.mxu0 0.0
    %116 = vmatpush2.msra.mxu0 0.0
    %117 = vmatprep.subr.mxu0 0.0
    %118 = vmatpush2.msra.mxu0 0.0
    %119 = vmatprep.mubr.f32.mxu0 0.0
    %120 = vmatmul.mubr.f32.gmra.mxu0 %v50
    %v121 = vpop.f32.mrf.mxu0
    %v122 = vadd.f32 0.0, %v121
    %v123 = vpop.f32.mrf.mxu0
    %124 = vmatprep.mubr.f32.mxu0 0.0
    %125 = vmatmul.mubr.f32.gmra.mxu0 %v53
    %v126 = vpop.f32.mrf.mxu0
    %v127 = vadd.f32 0.0, %v126
    %v128 = vpop.f32.mrf.mxu0
    %129 = vdwg.mxu0
    %vm130 = vcmask 261120
    %131 = vst.msk [vmem:[#allocation2] sm:$0xff] %vm130, %v122
    %132 = vst.msk [vmem:[#allocation2 + $0x8] sm:$0xff] %vm130, %v127
    // Predicated region
    $region10: #{graph_embedding_forward.1} parent=1 // pred_check
      _
    $region11: #{graph_embedding_forward.1} parent=1 // pred_check_branch
      %134 = sbr.rel (0) target = $region13
    $region12: #{graph_embedding_forward.1} parent=1 // pred_region
      %s136 = ssub.s32 256, 256
      %137 = vsyncadd [#allocation3], %s136
      %s138 = sshll.u32 [#allocation2], 4
      %s139 = int_to_ptr.vmem [resolvable:$true] %s138
      %144 = dma.vmem_to_hbm [thread:$0]  %s139, 256, %s2, [#allocation3], 128, 128, 8
    $region13: #{graph_embedding_forward.1} parent=1 // pred_fallthru
      _
    // Predicated region
    $region14: #{graph_embedding_forward.1} parent=1 // pred_check
      _
    $region15: #{graph_embedding_forward.1} parent=1 // pred_check_branch
      %146 = sbr.rel (0) target = $region17
    $region16: #{graph_embedding_forward.1} parent=1 // pred_region
      %147 = dma.done [#allocation3], 256
    $region17: #{graph_embedding_forward.1} parent=1 // pred_fallthru
      _
    %148 = vsyncpa [#allocation3], 1

</llo_original>
